<compile_context>
chip_gen: v6e
topology: v6e:2x2x1
jax: 0.10.0
libtpu: 0.0.40
codegen_flags: <defaults>
</compile_context>

<pallas_src>
import functools

import jax
import jax.numpy as jnp
import numpy as np
from jax.experimental import pallas as pl
from jax.experimental.pallas import tpu as pltpu


def _round_up(x, m):
    return (x + m - 1) // m * m


def _actvn(v):
    # F.leaky_relu(v, 0.2)
    return jnp.where(v > 0, v, 0.2 * v)


# ----------------------- pltpu.roll direction probe --------------------------
# One tiny one-off kernel (cached) to pin down the rotation direction so the
# static tap->shift mapping is robust across Pallas versions.
_ROLL_NUMPY_LIKE = None


def _roll_is_numpy_like():
    global _ROLL_NUMPY_LIKE
    if _ROLL_NUMPY_LIKE is None:
        def _probe(x_ref, o_ref):
            o_ref[...] = pltpu.roll(x_ref[...], 1, axis=1)

        x = jnp.tile(jnp.arange(128, dtype=jnp.float32)[None, :], (8, 1))
        y = pl.pallas_call(
            _probe, out_shape=jax.ShapeDtypeStruct((8, 128), jnp.float32))(x)
        # numpy semantics: np.roll(v, 1)[0] == v[-1] == 127
        _ROLL_NUMPY_LIKE = bool(jax.device_get(y)[0, 0] == 127.0)
    return _ROLL_NUMPY_LIKE


# --------------------------------- kernel ------------------------------------

def _conv3x3_cm(h, w_ref, bias, shifts):
    """3x3 'same' conv in channel-major layout as a single MXU matmul.

    h      : (Cin_p, L) f32 activation (flattened zero-padded spatial in lanes)
    w_ref  : (Cout_p, 9*Cin_p) bf16 weights, tap-major (matches `shifts` order)
    bias   : (Cout_p, 1) f32
    shifts : static tuple of 9 lane-roll amounts, rolled[:, j] == h[:, j + dy*P + dx]
    """
    slabs = [h if s == 0 else pltpu.roll(h, s, axis=1) for s in shifts]
    im = jnp.concatenate(slabs, axis=0).astype(jnp.bfloat16)      # (9*Cin_p, L)
    out = jnp.dot(w_ref[...], im, preferred_element_type=jnp.float32)
    return out + bias


def _resblock_kernel(x_ref, mask_ref, w0_ref, b0_ref, w1_ref, b1_ref, *rest,
                     shifts, learned_shortcut):
    if learned_shortcut:
        ws_ref, o_ref = rest
    else:
        (o_ref,) = rest

    a = x_ref[0]                                    # (C0p, L) f32

    # shortcut: pure pass-through when fin == fout (no identity matmul)
    if learned_shortcut:
        x_s = jnp.dot(ws_ref[...], a.astype(jnp.bfloat16),
                      preferred_element_type=jnp.float32)
    else:
        x_s = a

    # dx = conv_0(actvn(x))   (padding ring of `a` is already zero -> actvn(0) == 0)
    d = _conv3x3_cm(_actvn(a), w0_ref, b0_ref[...], shifts)
    # re-zero the padding ring / lane tail so it acts as conv_1's zero padding
    d = d * mask_ref[...]
    # dx = conv_1(actvn(dx))
    d = _conv3x3_cm(_actvn(d), w1_ref, b1_ref[...], shifts)

    o_ref[0] = x_s + 0.1 * d


# -------------------------------- wrapper ------------------------------------

def _prep_conv_weight(w_oihw, cout_p, cin_p):
    """torch OIHW -> (Cout_p, 9*Cin_p) bf16, column index = (ky*3+kx)*Cin_p + i."""
    o, i, kh, kw = w_oihw.shape
    w = jnp.transpose(w_oihw.astype(jnp.float32), (0, 2, 3, 1))   # (o, kh, kw, i)
    w = jnp.pad(w, ((0, cout_p - o), (0, 0), (0, 0), (0, cin_p - i)))
    return w.reshape(cout_p, kh * kw * cin_p).astype(jnp.bfloat16)


def resnet_block_pallas(x_nchw, params, *, fin, fout, fhidden):
    """x_nchw: (N, fin, H, W) f32. params: torch-layout weights (OIHW / (O,))."""
    N, C, H, W = x_nchw.shape
    assert C == fin
    learned_shortcut = fin != fout

    P = W + 2                       # zero-padded width
    G = H + 2                       # zero-padded height
    L = G * P                       # flattened padded spatial size
    Lp = _round_up(L, 128)          # lane-dense flattened size
    c0 = _round_up(fin, 8)
    c1 = _round_up(fhidden, 8)
    c2 = _round_up(fout, 8)

    # ---- host-side layout plumbing ----
    # NCHW -> 1 px spatial zero pad, channel pad to sublane multiple, flatten spatially.
    xp = jnp.pad(x_nchw.astype(jnp.float32),
                 ((0, 0), (0, c0 - fin), (1, 1), (1, 1)))
    xp = jnp.pad(xp.reshape(N, c0, L), ((0, 0), (0, 0), (0, Lp - L)))

    # interior mask: 1 on real pixels, 0 on the padding ring and lane tail.
    mask2d = jnp.pad(jnp.ones((H, W), jnp.float32), ((1, 1), (1, 1)))
    mask = jnp.pad(mask2d.reshape(1, L), ((0, 0), (0, Lp - L)))

    w0 = _prep_conv_weight(params["w0"], c1, c0)
    w1 = _prep_conv_weight(params["w1"], c2, c1)
    b0 = jnp.pad(params["b0"].astype(jnp.float32), (0, c1 - fhidden)).reshape(c1, 1)
    b1 = jnp.pad(params["b1"].astype(jnp.float32), (0, c2 - fout)).reshape(c2, 1)

    # static lane-roll amount per tap so that rolled[:, j] == h[:, j + dy*P + dx]
    numpy_like = _roll_is_numpy_like()
    shifts = []
    for ky in range(3):
        for kx in range(3):
            s = (ky - 1) * P + (kx - 1)
            shifts.append(((-s) if numpy_like else s) % Lp)
    shifts = tuple(shifts)

    kernel = functools.partial(_resblock_kernel, shifts=shifts,
                               learned_shortcut=learned_shortcut)

    inputs = [xp, mask, w0, b0, w1, b1]
    in_specs = [
        pl.BlockSpec((1, c0, Lp), lambda n: (n, 0, 0)),
        pl.BlockSpec((1, Lp), lambda n: (0, 0)),
        pl.BlockSpec((c1, 9 * c0), lambda n: (0, 0)),
        pl.BlockSpec((c1, 1), lambda n: (0, 0)),
        pl.BlockSpec((c2, 9 * c1), lambda n: (0, 0)),
        pl.BlockSpec((c2, 1), lambda n: (0, 0)),
    ]
    if learned_shortcut:
        ws = jnp.pad(params["ws"][:, :, 0, 0].astype(jnp.float32),
                     ((0, c2 - fout), (0, c0 - fin))).astype(jnp.bfloat16)
        inputs.append(ws)
        in_specs.append(pl.BlockSpec((c2, c0), lambda n: (0, 0)))
    else:
        assert c0 == c2  # pass-through residual needs matching padded channels

    out = pl.pallas_call(
        kernel,
        out_shape=jax.ShapeDtypeStruct((N, c2, Lp), jnp.float32),
        grid=(N,),
        in_specs=in_specs,
        out_specs=pl.BlockSpec((1, c2, Lp), lambda n: (n, 0, 0)),
        compiler_params=pltpu.CompilerParams(dimension_semantics=("parallel",)),
    )(*inputs)

    # (N, C2p, Lp) -> drop channel pad / lane tail / padding ring -> NCHW
    out = out[:, :fout, :L].reshape(N, fout, G, P)
    return out[:, :, 1:H + 1, 1:W + 1]


# ----------------------------- pure-JAX reference ----------------------------

def _ref_conv_nchw(x, w, b, padding):
    y = jax.lax.conv_general_dilated(
        x, w, window_strides=(1, 1),
        padding=((padding, padding), (padding, padding)),
        dimension_numbers=("NCHW", "OIHW", "NCHW"))
    if b is not None:
        y = y + b.reshape(1, -1, 1, 1)
    return y


def resnet_block_ref(x, params, *, fin, fout):
    x_s = _ref_conv_nchw(x, params["ws"], None, 0) if fin != fout else x
    dx = _ref_conv_nchw(_actvn(x), params["w0"], params["b0"], 1)
    dx = _ref_conv_nchw(_actvn(dx), params["w1"], params["b1"], 1)
    return x_s + 0.1 * dx


# ---------------------------------- main -------------------------------------

if __name__ == "__main__":
    def make_params(key, fin, fout, fhidden):
        k0, kb0, k1, kb1, ks = jax.random.split(key, 5)
        return {
            "w0": 0.1 * jax.random.normal(k0, (fhidden, fin, 3, 3), jnp.float32),
            "b0": 0.1 * jax.random.normal(kb0, (fhidden,), jnp.float32),
            "w1": 0.1 * jax.random.normal(k1, (fout, fhidden, 3, 3), jnp.float32),
            "b1": 0.1 * jax.random.normal(kb1, (fout,), jnp.float32),
            "ws": 0.1 * jax.random.normal(ks, (fout, fin, 1, 1), jnp.float32),
        }

    key = jax.random.PRNGKey(0)
    kp1, kp2, kx1, kx2 = jax.random.split(key, 4)

    # bf16 matmul operands (f32 accumulation) -> compare against the f32 reference
    # with a bf16-appropriate tolerance.
    RTOL = ATOL = 2e-2

    # config 1: learned shortcut (fin != fout)
    N, fin, fout, H, W = 2, 4, 8, 16, 16
    fhidden = min(fin, fout)  # PyTorch module default
    params = make_params(kp1, fin, fout, fhidden)
    x = jax.random.normal(kx1, (N, fin, H, W), jnp.float32)  # NCHW, like PyTorch
    out = jax.block_until_ready(
        resnet_block_pallas(x, params, fin=fin, fout=fout, fhidden=fhidden))
    ref = jax.block_until_ready(resnet_block_ref(x, params, fin=fin, fout=fout))
    np.testing.assert_allclose(np.asarray(out), np.asarray(ref), rtol=RTOL, atol=ATOL)

    # config 2: identity shortcut (fin == fout) -- exercises the pass-through path
    fin2 = fout2 = 8
    fh2 = min(fin2, fout2)
    params2 = make_params(kp2, fin2, fout2, fh2)
    x2 = jax.random.normal(kx2, (N, fin2, H, W), jnp.float32)
    out2 = jax.block_until_ready(
        resnet_block_pallas(x2, params2, fin=fin2, fout=fout2, fhidden=fh2))
    ref2 = jax.block_until_ready(resnet_block_ref(x2, params2, fin=fin2, fout=fout2))
    np.testing.assert_allclose(np.asarray(out2), np.asarray(ref2), rtol=RTOL, atol=ATOL)

    print("KERNEL_OK")
</pallas_src>

<mosaic_0001>
module attributes {stable_mosaic.version = 11 : i64} {
  func.func @_probe(%arg0: memref<8x128xf32, #tpu.memory_space<vmem>>, %arg1: memref<8x128xf32, #tpu.memory_space<vmem>>) attributes {dimension_semantics = [], scalar_prefetch = 0 : i64, scratch_operands = 0 : i64, tpu.core_type = #tpu.core_type<tc>} {
    %c0 = arith.constant 0 : index
    %c0_0 = arith.constant 0 : index
    %0 = vector.load %arg0[%c0, %c0_0] : memref<8x128xf32, #tpu.memory_space<vmem>>, vector<8x128xf32>
    %c1_i32 = arith.constant 1 : i32
    %1 = tpu.dynamic_rotate %0 by %c1_i32 dim 1 : vector<8x128xf32>, i32 -> vector<8x128xf32>
    %c0_1 = arith.constant 0 : index
    %c0_2 = arith.constant 0 : index
    %2 = vector.load %arg1[%c0_1, %c0_2] : memref<8x128xf32, #tpu.memory_space<vmem>>, vector<8x128xf32>
    tpu.vector_store %arg1[%c0_1, %c0_2], %1 {strides = array<i32>} : memref<8x128xf32, #tpu.memory_space<vmem>>, vector<8x128xf32>,
    return
  }
}

</mosaic_0001>

<llo_original>
// kernel: tpu_custom_call.1
$region0: #{tpu_custom_call.1}
  #allocation0 [shape = 'u32[]', space=smem, size = 0x4, offset = 0x4, fixed_abs, tag = 'smem constant byte address 0x4 - core index']
  #allocation1 [shape = 'u32[144,128]{1,0:T(1,128)}', space=vmem, size = 0x12000, scoped, tag = 'internal scratch']
  %s0 = inlined_call_operand.hbm [shape: f32[8,128], index: 0, kind: input, shape index: {}]
  %s1 = inlined_call_operand.hbm [shape: f32[8,128], index: 1, kind: output, shape index: {}]
  %s2 = sld [smem:[#allocation0]]
  $region18: #{tpu_custom_call.1} parent=0
    _
  %s4 = ssub.s32 1, %s2
  %s5 = scalar_select 0, %s4, %s2
  $region1: #{tpu_custom_call.1} parent=0
    #allocation2 [shape = 'u8[4096]{0}', space=vmem, size = 0x1000, scoped, tag = 'input window, operand 0, single buffered']
    #allocation3 [shape = 's32[1]{0}', space=sflag, size = 0x4, scoped, tag = 'scoped memory for tpu_custom_call.1']
    #allocation4 [shape = 's32[1]{0}', space=sflag, size = 0x4, scoped, tag = 'scoped memory for tpu_custom_call.1']
    #allocation5 [shape = 'u8[4096]{0}', space=vmem, size = 0x1000, scoped, tag = 'output window, operand 0, single buffered']
    %6 = vsyncpa [#allocation3], 0
    %7 = vsyncpa [#allocation4], 0
    // Predicated region
    $region2: #{tpu_custom_call.1} parent=1 // pred_check
      _
    $region3: #{tpu_custom_call.1} parent=1 // pred_check_branch
      %9 = sbr.rel (0) target = $region5
    $region4: #{tpu_custom_call.1} parent=1 // pred_region
      %s11 = ssub.s32 128, 128
      %12 = vsyncadd [#allocation3], %s11
      %s14 = sshll.u32 [#allocation2], 4
      %s15 = int_to_ptr.vmem [resolvable:$true] %s14
      %17 = dma.hbm_to_vmem [thread:$0]  %s0, 128, %s15, [#allocation3]
    $region5: #{tpu_custom_call.1} parent=1 // pred_fallthru
      _
    // Predicated region
    $region6: #{tpu_custom_call.1} parent=1 // pred_check
      _
    $region7: #{tpu_custom_call.1} parent=1 // pred_check_branch
      %19 = sbr.rel (0) target = $region9
    $region8: #{tpu_custom_call.1} parent=1 // pred_region
      %20 = dma.done [#allocation3], 128
    $region9: #{tpu_custom_call.1} parent=1 // pred_fallthru
      _
    %v21 = vld [vmem:[#allocation2] sm:$0xff]
    %22 = vrot.lane.b32.xlu0 %v21, 1
    %v23 = vpop.permute.xlu0 %22
    %24 = vst [vmem:[#allocation5] sm:$0xff] %v23
    // Predicated region
    $region10: #{tpu_custom_call.1} parent=1 // pred_check
      _
    $region11: #{tpu_custom_call.1} parent=1 // pred_check_branch
      %26 = sbr.rel (0) target = $region13
    $region12: #{tpu_custom_call.1} parent=1 // pred_region
      %s28 = ssub.s32 128, 128
      %29 = vsyncadd [#allocation4], %s28
      %s31 = sshll.u32 [#allocation5], 4
      %s32 = int_to_ptr.vmem [resolvable:$true] %s31
      %34 = dma.vmem_to_hbm [thread:$0]  %s32, 128, %s1, [#allocation4]
    $region13: #{tpu_custom_call.1} parent=1 // pred_fallthru
      _
    // Predicated region
    $region14: #{tpu_custom_call.1} parent=1 // pred_check
      _
    $region15: #{tpu_custom_call.1} parent=1 // pred_check_branch
      %36 = sbr.rel (0) target = $region17
    $region16: #{tpu_custom_call.1} parent=1 // pred_region
      %37 = dma.done [#allocation4], 128
    $region17: #{tpu_custom_call.1} parent=1 // pred_fallthru
      _
    %38 = vsyncpa [#allocation3], 1
    %39 = vsyncpa [#allocation4], 1

</llo_original>
